<compile_context>
chip_gen: v6e
topology: v6e:2x2x1
jax: 0.10.0
libtpu: 0.0.40
codegen_flags: <defaults>
</compile_context>

<pallas_src>
import functools
import math

import jax
import jax.numpy as jnp
from jax.experimental import pallas as pl
from jax.experimental.pallas import tpu as pltpu

_BLOCK_ROWS = 8192  # default rows per grid step; sweep 4K-16K per generation


def _mlp_kernel(xt_ref, params_ref, o_ref, *, d):
    # xt_ref:     (d, tm)    rows-on-lanes input tile
    # params_ref: (H, d+3)   packed as [w1^T | b1 | w2 | b2-in-row-0]
    # o_ref:      (1, tm)    lane-dense output tile
    xt = xt_ref[...]                         # (d, tm)
    p = params_ref[...]                      # (H, d+3), tiny & grid-resident
    w1t = p[:, :d]                           # (H, d)
    b1 = p[:, d:d + 1]                       # (H, 1), broadcasts along lanes
    w2 = p[:, d + 1:d + 2]                   # (H, 1)
    b2 = p[0:1, d + 2:d + 3]                 # (1, 1)

    # Layer 1 on the MXU: (H, d) @ (d, tm) -> (H, tm); bias + ReLU on the VPU.
    h = jnp.dot(w1t, xt, preferred_element_type=jnp.float32) + b1
    h = jnp.maximum(h, 0.0)

    # Layer 2 (H -> 1): VPU broadcast-mul + sublane (XLU) reduce -> (1, tm).
    y = jnp.sum(h * w2, axis=0, keepdims=True) + b2
    o_ref[...] = y.astype(o_ref.dtype)


def _pack_params(w1, b1, w2, b2):
    """Pack w1 (d,H), b1 (H,), w2 (H,1)|(H,), b2 (1,)|() into one (H, d+3) f32 array."""
    d, H = w1.shape
    w1t = jnp.asarray(w1, jnp.float32).T                           # (H, d)
    b1c = jnp.reshape(jnp.asarray(b1, jnp.float32), (H, 1))        # (H, 1)
    w2c = jnp.reshape(jnp.asarray(w2, jnp.float32), (H, 1))        # (H, 1)
    b2c = jnp.zeros((H, 1), jnp.float32).at[0, 0].set(
        jnp.reshape(jnp.asarray(b2, jnp.float32), ()))             # (H, 1), b2 in row 0
    return jnp.concatenate([w1t, b1c, w2c, b2c], axis=1)           # (H, d+3)


def _choose_row_tile(n, block_rows):
    """Row-tile (lane) size: full extent when small, else a multiple of 128,
    capped so the grid has >= 2 steps (v7x megacore) once N is large enough."""
    if n <= 128:
        return n                               # single full-extent block
    tm = max(128, (min(block_rows, n) // 128) * 128)
    if n > 2 * 128:
        half = -(-n // 2)                      # ceil(n / 2)
        half = -(-half // 128) * 128           # round up to a multiple of 128
        tm = min(tm, half)
    return tm


def _forward_impl(x, w1, b1, w2, b2, *, block_rows):
    N, d = x.shape
    H = w1.shape[1]
    params = _pack_params(w1, b1, w2, b2)          # (H, d+3)
    P = params.shape[1]
    xt = jnp.asarray(x, jnp.float32).T             # (d, N): rows ride the lane axis

    tm = _choose_row_tile(N, block_rows)
    grid = (pl.cdiv(N, tm),)

    kernel = functools.partial(_mlp_kernel, d=d)
    out_row = pl.pallas_call(
        kernel,
        out_shape=jax.ShapeDtypeStruct((1, N), jnp.float32),
        grid=grid,
        in_specs=[
            pl.BlockSpec((d, tm), lambda i: (0, i)),      # lane-dense input tile
            pl.BlockSpec((H, P), lambda i: (0, 0)),       # params resident across steps
        ],
        out_specs=pl.BlockSpec((1, tm), lambda i: (0, i)),  # lane-dense output row
        compiler_params=pltpu.CompilerParams(
            dimension_semantics=("parallel",),
            vmem_limit_bytes=32 * 1024 * 1024,
        ),
    )(xt, params)
    # (1, N) -> (N, 1): same element order, just the module's output shape.
    return out_row.reshape(N, 1)


@jax.jit
def augmented_invariant_net(x, w1, b1, w2, b2):
    return _forward_impl(x, w1, b1, w2, b2, block_rows=_BLOCK_ROWS)


def _reference_forward(x, w1, b1, w2, b2):
    # Pure-JAX reference of the PyTorch forward: Linear -> ReLU -> Linear.
    return jnp.maximum(x @ w1 + b1, 0.0) @ jnp.reshape(w2, (-1, 1)) \
        + jnp.asarray(b2).reshape(1, 1)


if __name__ == "__main__":
    key = jax.random.PRNGKey(0)
    N, d, H = 8, 10, 32

    k_x, k_w1, k_b1, k_w2, k_b2 = jax.random.split(key, 5)
    x = jax.random.normal(k_x, (N, d), dtype=jnp.float32)
    # Deterministic parameter init (roughly PyTorch Linear-style uniform).
    lim1 = 1.0 / math.sqrt(d)
    lim2 = 1.0 / math.sqrt(H)
    w1 = jax.random.uniform(k_w1, (d, H), jnp.float32, -lim1, lim1)
    b1 = jax.random.uniform(k_b1, (H,), jnp.float32, -lim1, lim1)
    w2 = jax.random.uniform(k_w2, (H, 1), jnp.float32, -lim2, lim2)
    b2 = jax.random.uniform(k_b2, (1,), jnp.float32, -lim2, lim2)

    # Small single-tile path (module-sized demo).
    out = jax.block_until_ready(augmented_invariant_net(x, w1, b1, w2, b2))
    ref = _reference_forward(x, w1, b1, w2, b2)
    assert out.shape == (N, 1), out.shape
    assert jnp.allclose(out, ref, rtol=1e-5, atol=1e-5), (out, ref)

    # Multi-tile path: grid of 2 parallel steps with a partial (masked) last
    # lane tile, exercising the lane-dense writeback.
    N2 = 300
    x2 = jax.random.normal(jax.random.PRNGKey(1), (N2, d), dtype=jnp.float32)
    out2 = jax.block_until_ready(augmented_invariant_net(x2, w1, b1, w2, b2))
    ref2 = _reference_forward(x2, w1, b1, w2, b2)
    assert out2.shape == (N2, 1), out2.shape
    assert jnp.allclose(out2, ref2, rtol=1e-5, atol=1e-5)

    print("KERNEL_OK")
</pallas_src>

<mosaic_0001>
module attributes {stable_mosaic.version = 11 : i64} {
  func.func @_mlp_kernel(%arg0: i32, %arg1: memref<10x8xf32, #tpu.memory_space<vmem>>, %arg2: memref<32x13xf32, #tpu.memory_space<vmem>>, %arg3: memref<1x8xf32, #tpu.memory_space<vmem>>) attributes {dimension_semantics = [#tpu.dimension_semantics<parallel>], iteration_bounds = array<i64: 1>, scalar_prefetch = 0 : i64, scratch_operands = 0 : i64, tpu.core_type = #tpu.core_type<tc>, window_params = [{transform_indices = @transform_0, window_bounds = array<i64: 10, 8>}, {pipeline_mode = #tpu.pipeline_mode<synchronous>, transform_indices = @transform_1, window_bounds = array<i64: 32, 13>}, {transform_indices = @transform_2, window_bounds = array<i64: 1, 8>}]} {
    %c0 = arith.constant 0 : index
    %c0_0 = arith.constant 0 : index
    %0 = vector.load %arg1[%c0, %c0_0] : memref<10x8xf32, #tpu.memory_space<vmem>>, vector<10x8xf32>
    %c0_1 = arith.constant 0 : index
    %c0_2 = arith.constant 0 : index
    %1 = vector.load %arg2[%c0_1, %c0_2] : memref<32x13xf32, #tpu.memory_space<vmem>>, vector<32x13xf32>
    %2 = vector.extract_strided_slice %1 {offsets = [0, 0], sizes = [32, 10], strides = [1, 1]} : vector<32x13xf32> to vector<32x10xf32>
    %3 = vector.extract_strided_slice %1 {offsets = [0, 10], sizes = [32, 1], strides = [1, 1]} : vector<32x13xf32> to vector<32x1xf32>
    %4 = vector.extract_strided_slice %1 {offsets = [0, 11], sizes = [32, 1], strides = [1, 1]} : vector<32x13xf32> to vector<32x1xf32>
    %5 = vector.extract_strided_slice %1 {offsets = [0, 12], sizes = [1, 1], strides = [1, 1]} : vector<32x13xf32> to vector<1x1xf32>
    %cst = arith.constant dense<0.000000e+00> : vector<32x8xf32>
    %6 = tpu.matmul %2, %0, %cst {dimension_numbers = #tpu.dot_dimension_numbers<[1], [0], [0], [1], [0, 0, 1, 1], [], []>} : vector<32x10xf32>, vector<10x8xf32>, vector<32x8xf32> -> vector<32x8xf32>
    %7 = vector.broadcast %3 : vector<32x1xf32> to vector<32x8xf32>
    %8 = arith.addf %6, %7 : vector<32x8xf32>
    %cst_3 = arith.constant 0.000000e+00 : f32
    %9 = vector.broadcast %cst_3 : f32 to vector<32x8xf32>
    %10 = arith.maximumf %8, %9 : vector<32x8xf32>
    %11 = vector.broadcast %4 : vector<32x1xf32> to vector<32x8xf32>
    %12 = arith.mulf %10, %11 : vector<32x8xf32>
    %cst_4 = arith.constant dense<0.000000e+00> : vector<8xf32>
    %13 = vector.multi_reduction <add>, %12, %cst_4 [0] : vector<32x8xf32> to vector<8xf32>
    %14 = vector.shape_cast %13 : vector<8xf32> to vector<1x8xf32>
    %15 = vector.broadcast %5 : vector<1x1xf32> to vector<1x8xf32>
    %16 = arith.addf %14, %15 : vector<1x8xf32>
    %c0_5 = arith.constant 0 : index
    %c0_6 = arith.constant 0 : index
    %17 = vector.load %arg3[%c0_5, %c0_6] : memref<1x8xf32, #tpu.memory_space<vmem>>, vector<1x8xf32>
    tpu.vector_store %arg3[%c0_5, %c0_6], %16 {strides = array<i32>} : memref<1x8xf32, #tpu.memory_space<vmem>>, vector<1x8xf32>,
    return
  }
  func.func @transform_0(%arg0: i32) -> (i32, i32) {
    %c0_i32 = arith.constant 0 : i32
    %c0_i32_0 = arith.constant 0 : i32
    return %c0_i32, %arg0 : i32, i32
  }
  func.func @transform_1(%arg0: i32) -> (i32, i32) {
    %c0_i32 = arith.constant 0 : i32
    %c0_i32_0 = arith.constant 0 : i32
    %c0_i32_1 = arith.constant 0 : i32
    return %c0_i32, %c0_i32_0 : i32, i32
  }
  func.func @transform_2(%arg0: i32) -> (i32, i32) {
    %c0_i32 = arith.constant 0 : i32
    %c0_i32_0 = arith.constant 0 : i32
    return %c0_i32, %arg0 : i32, i32
  }
}

</mosaic_0001>

<llo_original>
// kernel: augmented_invariant_net.1
$region0: #{augmented_invariant_net.1}
  #allocation0 [shape = 'u32[]', space=smem, size = 0x4, offset = 0x4, fixed_abs, tag = 'smem constant byte address 0x4 - core index']
  #allocation1 [shape = 'u32[144,128]{1,0:T(1,128)}', space=vmem, size = 0x12000, scoped, tag = 'internal scratch']
  %s0 = inlined_call_operand.vmem [shape: f32[10,8], index: 0, kind: input, shape index: {}]
  %s1 = inlined_call_operand.vmem [shape: f32[32,13], index: 1, kind: input, shape index: {}]
  %s2 = inlined_call_operand.hbm [shape: f32[1,8], index: 2, kind: output, shape index: {}]
  %s3 = sld [smem:[#allocation0]]
  $region18: #{augmented_invariant_net.1} parent=0
    _
  %s5 = ssub.s32 1, %s3
  %s6 = scalar_select 0, %s5, %s3
  $region1: #{augmented_invariant_net.1} parent=0
    #allocation2 [shape = 'u8[512]{0}', space=vmem, size = 0x400, scoped, tag = 'output window, operand 0, single buffered']
    #allocation3 [shape = 's32[1]{0}', space=sflag, size = 0x4, scoped, tag = 'scoped memory for augmented_invariant_net.1']
    %7 = vsyncpa [#allocation3], 0
    // Predicated region
    $region2: #{augmented_invariant_net.1} parent=1 // pred_check
      _
    $region3: #{augmented_invariant_net.1} parent=1 // pred_check_branch
      %9 = sbr.rel (0) target = $region5
    $region4: #{augmented_invariant_net.1} parent=1 // pred_region
      _
    $region5: #{augmented_invariant_net.1} parent=1 // pred_fallthru
      _
    // Predicated region
    $region6: #{augmented_invariant_net.1} parent=1 // pred_check
      _
    $region7: #{augmented_invariant_net.1} parent=1 // pred_check_branch
      %11 = sbr.rel (0) target = $region9
    $region8: #{augmented_invariant_net.1} parent=1 // pred_region
      _
    $region9: #{augmented_invariant_net.1} parent=1 // pred_fallthru
      _
    %v12 = vld [vmem:[%s0] sm:$0xff]
    %v13 = vld [vmem:[%s0 + $0x8] sm:$0x3]
    %v14 = vld [vmem:[%s1] sm:$0xff]
    %v15 = vld [vmem:[%s1 + $0x8] sm:$0xff]
    %v16 = vld [vmem:[%s1 + $0x10] sm:$0xff]
    %v17 = vld [vmem:[%s1 + $0x18] sm:$0xff]
    %19 = vset.pattern.permute.xlu0 10
    %20 = vperm.xlu0 %19, %v14
    %v21 = vpop.permute.xlu0 %20
    %24 = vset.pattern.permute.xlu0 10
    %25 = vperm.xlu0 %24, %v15
    %v26 = vpop.permute.xlu0 %25
    %29 = vset.pattern.permute.xlu0 10
    %30 = vperm.xlu0 %29, %v16
    %v31 = vpop.permute.xlu0 %30
    %34 = vset.pattern.permute.xlu0 10
    %35 = vperm.xlu0 %34, %v17
    %v36 = vpop.permute.xlu0 %35
    %vm38 = vcmask 80896
    %v39 = vsel %vm38, %v14, 0
    %v41 = vsel %vm38, %v15, 0
    %v43 = vsel %vm38, %v16, 0
    %v45 = vsel %vm38, %v17, 0
    %vm47 = vcmask 1041408
    %v49 = vsel %vm47, %v13, 0
    %51 = vmatprep.subr.mxu0 0.0
    %52 = vmatpush1.msra.mxu0 0.0
    %53 = vmatprep.subr.mxu0 0.0
    %54 = vmatpush1.msra.mxu0 0.0
    %55 = vmatprep.subr.mxu0 0.0
    %56 = vmatpush1.msra.mxu0 0.0
    %57 = vmatprep.subr.mxu0 0.0
    %58 = vmatpush1.msra.mxu0 0.0
    %59 = vmatprep.subr.mxu0 0.0
    %60 = vmatpush1.msra.mxu0 0.0
    %61 = vmatprep.subr.mxu0 0.0
    %62 = vmatpush1.msra.mxu0 0.0
    %63 = vmatprep.subr.mxu0 0.0
    %64 = vmatpush1.msra.mxu0 0.0
    %65 = vmatprep.subr.mxu0 0.0
    %66 = vmatpush1.msra.mxu0 0.0
    %67 = vmatprep.subr.mxu0 0.0
    %68 = vmatpush1.msra.mxu0 0.0
    %69 = vmatprep.subr.mxu0 0.0
    %70 = vmatpush1.msra.mxu0 0.0
    %71 = vmatprep.subr.mxu0 0.0
    %72 = vmatpush1.msra.mxu0 0.0
    %73 = vmatprep.subr.mxu0 0.0
    %74 = vmatpush1.msra.mxu0 0.0
    %75 = vmatprep.subr.mxu0 0.0
    %76 = vmatpush1.msra.mxu0 0.0
    %77 = vmatprep.subr.mxu0 0.0
    %78 = vmatpush1.msra.mxu0 0.0
    %79 = vmatprep.subr.mxu0 0.0
    %80 = vmatpush1.msra.mxu0 %v49
    %81 = vmatprep.subr.mxu0 0.0
    %82 = vmatpush1.msra.mxu0 %v12
    %83 = vmatprep.subr.mxu0 0.0
    %84 = vmatpush2.msra.mxu0 0.0
    %85 = vmatprep.subr.mxu0 0.0
    %86 = vmatpush2.msra.mxu0 0.0
    %87 = vmatprep.subr.mxu0 0.0
    %88 = vmatpush2.msra.mxu0 0.0
    %89 = vmatprep.subr.mxu0 0.0
    %90 = vmatpush2.msra.mxu0 0.0
    %91 = vmatprep.subr.mxu0 0.0
    %92 = vmatpush2.msra.mxu0 0.0
    %93 = vmatprep.subr.mxu0 0.0
    %94 = vmatpush2.msra.mxu0 0.0
    %95 = vmatprep.subr.mxu0 0.0
    %96 = vmatpush2.msra.mxu0 0.0
    %97 = vmatprep.subr.mxu0 0.0
    %98 = vmatpush2.msra.mxu0 0.0
    %99 = vmatprep.subr.mxu0 0.0
    %100 = vmatpush2.msra.mxu0 0.0
    %101 = vmatprep.subr.mxu0 0.0
    %102 = vmatpush2.msra.mxu0 0.0
    %103 = vmatprep.subr.mxu0 0.0
    %104 = vmatpush2.msra.mxu0 0.0
    %105 = vmatprep.subr.mxu0 0.0
    %106 = vmatpush2.msra.mxu0 0.0
    %107 = vmatprep.subr.mxu0 0.0
    %108 = vmatpush2.msra.mxu0 0.0
    %109 = vmatprep.subr.mxu0 0.0
    %110 = vmatpush2.msra.mxu0 0.0
    %111 = vmatprep.subr.mxu0 0.0
    %112 = vmatpush2.msra.mxu0 0.0
    %113 = vmatprep.subr.mxu0 0.0
    %114 = vmatpush2.msra.mxu0 0.0
    %115 = vmatprep.mubr.f32.mxu0 0.0
    %116 = vmatmul.mubr.f32.gmra.mxu0 %v39
    %v117 = vpop.f32.mrf.mxu0
    %v118 = vadd.f32 %v21, %v117
    %v119 = vpop.f32.mrf.mxu0
    %120 = vmatprep.mubr.f32.mxu0 0.0
    %121 = vmatmul.mubr.f32.gmra.mxu0 %v41
    %v122 = vpop.f32.mrf.mxu0
    %v123 = vadd.f32 %v26, %v122
    %v124 = vpop.f32.mrf.mxu0
    %125 = vmatprep.mubr.f32.mxu0 0.0
    %126 = vmatmul.mubr.f32.gmra.mxu0 %v43
    %v127 = vpop.f32.mrf.mxu0
    %v128 = vadd.f32 %v31, %v127
    %v129 = vpop.f32.mrf.mxu0
    %130 = vmatprep.mubr.f32.mxu0 0.0
    %131 = vmatmul.mubr.f32.gmra.mxu0 %v45
    %v132 = vpop.f32.mrf.mxu0
    %v133 = vadd.f32 %v36, %v132
    %v134 = vpop.f32.mrf.mxu0
    %135 = vdwg.mxu0
    %v136 = vmax.f32 %v118, 0.0
    %v137 = vmax.f32 %v123, 0.0
    %v138 = vmax.f32 %v128, 0.0
    %v139 = vmax.f32 %v133, 0.0
    %140 = vset.pattern.permute.xlu0 11
    %141 = vperm.xlu0 %140, %v14
    %v142 = vpop.permute.xlu0 %141
    %144 = vset.pattern.permute.xlu0 11
    %145 = vperm.xlu0 %144, %v15
    %v146 = vpop.permute.xlu0 %145
    %148 = vset.pattern.permute.xlu0 11
    %149 = vperm.xlu0 %148, %v16
    %v150 = vpop.permute.xlu0 %149
    %152 = vset.pattern.permute.xlu0 11
    %153 = vperm.xlu0 %152, %v17
    %v154 = vpop.permute.xlu0 %153
    %v156 = vmul.f32 %v136, %v142
    %v157 = vmul.f32 %v137, %v146
    %v158 = vmul.f32 %v138, %v150
    %v159 = vmul.f32 %v139, %v154
    %vm160 = vcmask 64512
    %v161 = vsel %vm160, %v156, 0.0
    %v162 = vsel %vm160, %v157, 0.0
    %v163 = vadd.f32 %v161, %v162
    %v164 = vsel %vm160, %v158, 0.0
    %v165 = vadd.f32 %v163, %v164
    %v166 = vsel %vm160, %v159, 0.0
    %v167 = vadd.f32 %v165, %v166
    %v168 = vrot.slane %v167, 4
    %v169 = vadd.f32 %v167, %v168
    %v170 = vrot.slane %v169, 2
    %v171 = vadd.f32 %v169, %v170
    %v172 = vrot.slane %v171, 1
    %v173 = vadd.f32 %v171, %v172
    %174 = vset.pattern.permute.xlu0 12
    %175 = vperm.xlu0 %174, %v14
    %v176 = vpop.permute.xlu0 %175
    %v178 = vadd.f32 %v173, %v176
    %vm179 = vcmask 57344
    %180 = vst.msk [vmem:[#allocation2] sm:$0x1] %vm179, %v178
    // Predicated region
    $region10: #{augmented_invariant_net.1} parent=1 // pred_check
      _
    $region11: #{augmented_invariant_net.1} parent=1 // pred_check_branch
      %182 = sbr.rel (0) target = $region13
    $region12: #{augmented_invariant_net.1} parent=1 // pred_region
      %s184 = ssub.s32 16, 16
      %185 = vsyncadd [#allocation3], %s184
      %s187 = sshll.u32 [#allocation2], 4
      %s188 = int_to_ptr.vmem [resolvable:$true] %s187
      %190 = dma.vmem_to_hbm [thread:$0]  %s188, 16, %s2, [#allocation3]
    $region13: #{augmented_invariant_net.1} parent=1 // pred_fallthru
      _
    // Predicated region
    $region14: #{augmented_invariant_net.1} parent=1 // pred_check
      _
    $region15: #{augmented_invariant_net.1} parent=1 // pred_check_branch
      %192 = sbr.rel (0) target = $region17
    $region16: #{augmented_invariant_net.1} parent=1 // pred_region
      %193 = dma.done [#allocation3], 16
    $region17: #{augmented_invariant_net.1} parent=1 // pred_fallthru
      _
    %194 = vsyncpa [#allocation3], 1

</llo_original>
